<compile_context>
chip_gen: v7x
topology: tpu7x:2x2x1
jax: 0.10.0
libtpu: 0.0.40
codegen_flags: <defaults>
</compile_context>

<pallas_src>
import math

import jax
import jax.numpy as jnp
from jax.experimental import pallas as pl
from jax.experimental.pallas import tpu as pltpu


def _dense_vpu(h_in, w, b):
    """h_out[o, :] = sum_k w[o, k] * h_in[k, :] + b[o].

    h_in: (in_f, TILE_B), w: (out_f, in_f) (torch layout), b: (out_f, 1).
    Unrolled over the tiny in_f so every multiply/add is a full-lane VPU op
    on a (out_f, TILE_B) slab; no MXU involvement.
    """
    n_in = w.shape[1]
    acc = w[:, 0:1] * h_in[0:1, :]
    for k in range(1, n_in):
        acc = acc + w[:, k:k + 1] * h_in[k:k + 1, :]
    return acc + b


def value_net_kernel(x_ref,
                     w1_ref, b1_ref,
                     w2_ref, b2_ref,
                     w3_ref, b3_ref,
                     w4_ref, b4_ref,
                     out_ref):
    """One batch tile: x_ref (3, TILE_B) -> out_ref (1, TILE_B)."""
    x = x_ref[...]                       # (3, TILE_B), batch on lanes
    w1 = w1_ref[...]                     # (20, 3)
    w2 = w2_ref[...]                     # (26, 20)
    w3 = w3_ref[...]                     # (2, 26)
    w4 = w4_ref[...]                     # (1, 2)

    h1 = jnp.tanh(_dense_vpu(x, w1, b1_ref[...]))    # (20, TILE_B)
    h2 = jnp.tanh(_dense_vpu(h1, w2, b2_ref[...]))   # (26, TILE_B)
    h3 = jnp.tanh(_dense_vpu(h2, w3, b3_ref[...]))   # (2,  TILE_B)
    out = _dense_vpu(h3, w4, b4_ref[...])            # (1,  TILE_B)

    out_ref[...] = out.astype(out_ref.dtype)         # lane-dense unmasked store


def value_network_forward(x, params, tile_b=1024):
    """x: (B, input_dims) float32 -> (B, out_dims) float32."""
    B, in_dim = x.shape
    out_dim = params["w4"].shape[0]
    lane = 128

    # Tile size: multiple of 128 lanes, no bigger than the (padded) batch.
    b_lane = ((B + lane - 1) // lane) * lane
    tile_b = max(lane, ((min(tile_b, b_lane) + lane - 1) // lane) * lane)
    b_pad = ((B + tile_b - 1) // tile_b) * tile_b

    # Batch-on-lanes layout + host-side padding of the remainder tile.
    x_t = jnp.pad(x.T.astype(jnp.float32), ((0, 0), (0, b_pad - B)))  # (3, b_pad)

    grid = (pl.cdiv(b_pad, tile_b),)
    const = lambda i: (0, 0)   # weights/biases: resident block, no re-DMA

    out_t = pl.pallas_call(
        value_net_kernel,
        out_shape=jax.ShapeDtypeStruct((out_dim, b_pad), jnp.float32),
        grid=grid,
        in_specs=[
            pl.BlockSpec((in_dim, tile_b), lambda i: (0, i)),   # x: streamed
            pl.BlockSpec(params["w1"].shape, const),
            pl.BlockSpec(params["b1"].shape, const),
            pl.BlockSpec(params["w2"].shape, const),
            pl.BlockSpec(params["b2"].shape, const),
            pl.BlockSpec(params["w3"].shape, const),
            pl.BlockSpec(params["b3"].shape, const),
            pl.BlockSpec(params["w4"].shape, const),
            pl.BlockSpec(params["b4"].shape, const),
        ],
        out_specs=pl.BlockSpec((out_dim, tile_b), lambda i: (0, i)),
        compiler_params=pltpu.CompilerParams(
            dimension_semantics=("parallel",),        # 2 TCs on v7x
            vmem_limit_bytes=32 * 1024 * 1024,        # explicit, safe on 64 MiB v7x VMEM
        ),
    )(
        x_t,
        params["w1"], params["b1"],
        params["w2"], params["b2"],
        params["w3"], params["b3"],
        params["w4"], params["b4"],
    )

    return out_t[:, :B].T                              # (B, out_dims)


def xavier_uniform(key, fan_in, fan_out, dtype=jnp.float32):
    """Matches nn.init.xavier_uniform_ for a (fan_out, fan_in) torch weight."""
    limit = math.sqrt(6.0 / (fan_in + fan_out))
    return jax.random.uniform(key, (fan_out, fan_in), dtype,
                              minval=-limit, maxval=limit)


def init_params(key, input_dims=3, fc1_dims=20, fc2_dims=26, fc3_dims=2, out_dims=1):
    k1, k2, k3, k4 = jax.random.split(key, 4)
    bias_val = 0.001
    return {
        # Torch layout (out, in); kernel consumes it directly as W @ X.
        "w1": xavier_uniform(k1, input_dims, fc1_dims),
        "b1": jnp.full((fc1_dims, 1), bias_val, jnp.float32),
        "w2": xavier_uniform(k2, fc1_dims, fc2_dims),
        "b2": jnp.full((fc2_dims, 1), bias_val, jnp.float32),
        "w3": xavier_uniform(k3, fc2_dims, fc3_dims),
        "b3": jnp.full((fc3_dims, 1), bias_val, jnp.float32),
        "w4": xavier_uniform(k4, fc3_dims, out_dims),
        "b4": jnp.full((out_dims, 1), bias_val, jnp.float32),
    }


def value_network_ref(x, p):
    """Pure-JAX reference of the PyTorch forward (batch-major)."""
    h = jnp.tanh(x @ p["w1"].T + p["b1"][:, 0])
    h = jnp.tanh(h @ p["w2"].T + p["b2"][:, 0])
    h = jnp.tanh(h @ p["w3"].T + p["b3"][:, 0])
    return h @ p["w4"].T + p["b4"][:, 0]


if __name__ == "__main__":
    key = jax.random.PRNGKey(0)
    pkey, xkey = jax.random.split(key)

    params = init_params(pkey, input_dims=3, fc1_dims=20, fc2_dims=26,
                         fc3_dims=2, out_dims=1)

    # Small batch (single tile).
    batch = 8
    x = jax.random.normal(xkey, (batch, 3), dtype=jnp.float32)
    out = jax.block_until_ready(value_network_forward(x, params))
    ref = value_network_ref(x, params)
    assert out.shape == (batch, 1), out.shape
    assert jnp.allclose(out, ref, atol=2e-5, rtol=1e-4), (out, ref)

    # Multi-tile grid + non-multiple remainder (exercises padding/tail path).
    x2 = jax.random.normal(jax.random.PRNGKey(1), (300, 3), dtype=jnp.float32)
    out2 = jax.block_until_ready(value_network_forward(x2, params, tile_b=128))
    ref2 = value_network_ref(x2, params)
    assert out2.shape == (300, 1), out2.shape
    assert jnp.allclose(out2, ref2, atol=2e-5, rtol=1e-4)

    print("KERNEL_OK")
</pallas_src>

<mosaic_0001>
module attributes {stable_mosaic.version = 11 : i64} {
  func.func @value_net_kernel(%arg0: i32, %arg1: memref<3x128xf32, #tpu.memory_space<vmem>>, %arg2: memref<20x3xf32, #tpu.memory_space<vmem>>, %arg3: memref<20x1xf32, #tpu.memory_space<vmem>>, %arg4: memref<26x20xf32, #tpu.memory_space<vmem>>, %arg5: memref<26x1xf32, #tpu.memory_space<vmem>>, %arg6: memref<2x26xf32, #tpu.memory_space<vmem>>, %arg7: memref<2x1xf32, #tpu.memory_space<vmem>>, %arg8: memref<1x2xf32, #tpu.memory_space<vmem>>, %arg9: memref<1x1xf32, #tpu.memory_space<vmem>>, %arg10: memref<1x128xf32, #tpu.memory_space<vmem>>) attributes {dimension_semantics = [#tpu.dimension_semantics<parallel>], iteration_bounds = array<i64: 1>, scalar_prefetch = 0 : i64, scratch_operands = 0 : i64, tpu.core_type = #tpu.core_type<tc>, window_params = [{transform_indices = @transform_0, window_bounds = array<i64: 3, 128>}, {pipeline_mode = #tpu.pipeline_mode<synchronous>, transform_indices = @transform_1, window_bounds = array<i64: 20, 3>}, {pipeline_mode = #tpu.pipeline_mode<synchronous>, transform_indices = @transform_2, window_bounds = array<i64: 20, 1>}, {pipeline_mode = #tpu.pipeline_mode<synchronous>, transform_indices = @transform_3, window_bounds = array<i64: 26, 20>}, {pipeline_mode = #tpu.pipeline_mode<synchronous>, transform_indices = @transform_4, window_bounds = array<i64: 26, 1>}, {pipeline_mode = #tpu.pipeline_mode<synchronous>, transform_indices = @transform_5, window_bounds = array<i64: 2, 26>}, {pipeline_mode = #tpu.pipeline_mode<synchronous>, transform_indices = @transform_6, window_bounds = array<i64: 2, 1>}, {pipeline_mode = #tpu.pipeline_mode<synchronous>, transform_indices = @transform_7, window_bounds = array<i64: 1, 2>}, {pipeline_mode = #tpu.pipeline_mode<synchronous>, transform_indices = @transform_8, window_bounds = array<i64: 1, 1>}, {transform_indices = @transform_9, window_bounds = array<i64: 1, 128>}]} {
    %c0 = arith.constant 0 : index
    %c0_0 = arith.constant 0 : index
    %0 = vector.load %arg1[%c0, %c0_0] : memref<3x128xf32, #tpu.memory_space<vmem>>, vector<3x128xf32>
    %c0_1 = arith.constant 0 : index
    %c0_2 = arith.constant 0 : index
    %1 = vector.load %arg2[%c0_1, %c0_2] : memref<20x3xf32, #tpu.memory_space<vmem>>, vector<20x3xf32>
    %c0_3 = arith.constant 0 : index
    %c0_4 = arith.constant 0 : index
    %2 = vector.load %arg4[%c0_3, %c0_4] : memref<26x20xf32, #tpu.memory_space<vmem>>, vector<26x20xf32>
    %c0_5 = arith.constant 0 : index
    %c0_6 = arith.constant 0 : index
    %3 = vector.load %arg6[%c0_5, %c0_6] : memref<2x26xf32, #tpu.memory_space<vmem>>, vector<2x26xf32>
    %c0_7 = arith.constant 0 : index
    %c0_8 = arith.constant 0 : index
    %4 = vector.load %arg8[%c0_7, %c0_8] : memref<1x2xf32, #tpu.memory_space<vmem>>, vector<1x2xf32>
    %c0_9 = arith.constant 0 : index
    %c0_10 = arith.constant 0 : index
    %5 = vector.load %arg3[%c0_9, %c0_10] : memref<20x1xf32, #tpu.memory_space<vmem>>, vector<20x1xf32>
    %6 = vector.extract_strided_slice %1 {offsets = [0, 0], sizes = [20, 1], strides = [1, 1]} : vector<20x3xf32> to vector<20x1xf32>
    %7 = vector.extract_strided_slice %0 {offsets = [0, 0], sizes = [1, 128], strides = [1, 1]} : vector<3x128xf32> to vector<1x128xf32>
    %8 = vector.broadcast %6 : vector<20x1xf32> to vector<20x128xf32>
    %9 = vector.broadcast %7 : vector<1x128xf32> to vector<20x128xf32>
    %10 = arith.mulf %8, %9 : vector<20x128xf32>
    %11 = vector.extract_strided_slice %1 {offsets = [0, 1], sizes = [20, 1], strides = [1, 1]} : vector<20x3xf32> to vector<20x1xf32>
    %12 = vector.extract_strided_slice %0 {offsets = [1, 0], sizes = [1, 128], strides = [1, 1]} : vector<3x128xf32> to vector<1x128xf32>
    %13 = vector.broadcast %11 : vector<20x1xf32> to vector<20x128xf32>
    %14 = vector.broadcast %12 : vector<1x128xf32> to vector<20x128xf32>
    %15 = arith.mulf %13, %14 : vector<20x128xf32>
    %16 = arith.addf %10, %15 : vector<20x128xf32>
    %17 = vector.extract_strided_slice %1 {offsets = [0, 2], sizes = [20, 1], strides = [1, 1]} : vector<20x3xf32> to vector<20x1xf32>
    %18 = vector.extract_strided_slice %0 {offsets = [2, 0], sizes = [1, 128], strides = [1, 1]} : vector<3x128xf32> to vector<1x128xf32>
    %19 = vector.broadcast %17 : vector<20x1xf32> to vector<20x128xf32>
    %20 = vector.broadcast %18 : vector<1x128xf32> to vector<20x128xf32>
    %21 = arith.mulf %19, %20 : vector<20x128xf32>
    %22 = arith.addf %16, %21 : vector<20x128xf32>
    %23 = vector.broadcast %5 : vector<20x1xf32> to vector<20x128xf32>
    %24 = arith.addf %22, %23 : vector<20x128xf32>
    %25 = math.tanh %24 : vector<20x128xf32>
    %c0_11 = arith.constant 0 : index
    %c0_12 = arith.constant 0 : index
    %26 = vector.load %arg5[%c0_11, %c0_12] : memref<26x1xf32, #tpu.memory_space<vmem>>, vector<26x1xf32>
    %27 = vector.extract_strided_slice %2 {offsets = [0, 0], sizes = [26, 1], strides = [1, 1]} : vector<26x20xf32> to vector<26x1xf32>
    %28 = vector.extract_strided_slice %25 {offsets = [0, 0], sizes = [1, 128], strides = [1, 1]} : vector<20x128xf32> to vector<1x128xf32>
    %29 = vector.broadcast %27 : vector<26x1xf32> to vector<26x128xf32>
    %30 = vector.broadcast %28 : vector<1x128xf32> to vector<26x128xf32>
    %31 = arith.mulf %29, %30 : vector<26x128xf32>
    %32 = vector.extract_strided_slice %2 {offsets = [0, 1], sizes = [26, 1], strides = [1, 1]} : vector<26x20xf32> to vector<26x1xf32>
    %33 = vector.extract_strided_slice %25 {offsets = [1, 0], sizes = [1, 128], strides = [1, 1]} : vector<20x128xf32> to vector<1x128xf32>
    %34 = vector.broadcast %32 : vector<26x1xf32> to vector<26x128xf32>
    %35 = vector.broadcast %33 : vector<1x128xf32> to vector<26x128xf32>
    %36 = arith.mulf %34, %35 : vector<26x128xf32>
    %37 = arith.addf %31, %36 : vector<26x128xf32>
    %38 = vector.extract_strided_slice %2 {offsets = [0, 2], sizes = [26, 1], strides = [1, 1]} : vector<26x20xf32> to vector<26x1xf32>
    %39 = vector.extract_strided_slice %25 {offsets = [2, 0], sizes = [1, 128], strides = [1, 1]} : vector<20x128xf32> to vector<1x128xf32>
    %40 = vector.broadcast %38 : vector<26x1xf32> to vector<26x128xf32>
    %41 = vector.broadcast %39 : vector<1x128xf32> to vector<26x128xf32>
    %42 = arith.mulf %40, %41 : vector<26x128xf32>
    %43 = arith.addf %37, %42 : vector<26x128xf32>
    %44 = vector.extract_strided_slice %2 {offsets = [0, 3], sizes = [26, 1], strides = [1, 1]} : vector<26x20xf32> to vector<26x1xf32>
    %45 = vector.extract_strided_slice %25 {offsets = [3, 0], sizes = [1, 128], strides = [1, 1]} : vector<20x128xf32> to vector<1x128xf32>
    %46 = vector.broadcast %44 : vector<26x1xf32> to vector<26x128xf32>
    %47 = vector.broadcast %45 : vector<1x128xf32> to vector<26x128xf32>
    %48 = arith.mulf %46, %47 : vector<26x128xf32>
    %49 = arith.addf %43, %48 : vector<26x128xf32>
    %50 = vector.extract_strided_slice %2 {offsets = [0, 4], sizes = [26, 1], strides = [1, 1]} : vector<26x20xf32> to vector<26x1xf32>
    %51 = vector.extract_strided_slice %25 {offsets = [4, 0], sizes = [1, 128], strides = [1, 1]} : vector<20x128xf32> to vector<1x128xf32>
    %52 = vector.broadcast %50 : vector<26x1xf32> to vector<26x128xf32>
    %53 = vector.broadcast %51 : vector<1x128xf32> to vector<26x128xf32>
    %54 = arith.mulf %52, %53 : vector<26x128xf32>
    %55 = arith.addf %49, %54 : vector<26x128xf32>
    %56 = vector.extract_strided_slice %2 {offsets = [0, 5], sizes = [26, 1], strides = [1, 1]} : vector<26x20xf32> to vector<26x1xf32>
    %57 = vector.extract_strided_slice %25 {offsets = [5, 0], sizes = [1, 128], strides = [1, 1]} : vector<20x128xf32> to vector<1x128xf32>
    %58 = vector.broadcast %56 : vector<26x1xf32> to vector<26x128xf32>
    %59 = vector.broadcast %57 : vector<1x128xf32> to vector<26x128xf32>
    %60 = arith.mulf %58, %59 : vector<26x128xf32>
    %61 = arith.addf %55, %60 : vector<26x128xf32>
    %62 = vector.extract_strided_slice %2 {offsets = [0, 6], sizes = [26, 1], strides = [1, 1]} : vector<26x20xf32> to vector<26x1xf32>
    %63 = vector.extract_strided_slice %25 {offsets = [6, 0], sizes = [1, 128], strides = [1, 1]} : vector<20x128xf32> to vector<1x128xf32>
    %64 = vector.broadcast %62 : vector<26x1xf32> to vector<26x128xf32>
    %65 = vector.broadcast %63 : vector<1x128xf32> to vector<26x128xf32>
    %66 = arith.mulf %64, %65 : vector<26x128xf32>
    %67 = arith.addf %61, %66 : vector<26x128xf32>
    %68 = vector.extract_strided_slice %2 {offsets = [0, 7], sizes = [26, 1], strides = [1, 1]} : vector<26x20xf32> to vector<26x1xf32>
    %69 = vector.extract_strided_slice %25 {offsets = [7, 0], sizes = [1, 128], strides = [1, 1]} : vector<20x128xf32> to vector<1x128xf32>
    %70 = vector.broadcast %68 : vector<26x1xf32> to vector<26x128xf32>
    %71 = vector.broadcast %69 : vector<1x128xf32> to vector<26x128xf32>
    %72 = arith.mulf %70, %71 : vector<26x128xf32>
    %73 = arith.addf %67, %72 : vector<26x128xf32>
    %74 = vector.extract_strided_slice %2 {offsets = [0, 8], sizes = [26, 1], strides = [1, 1]} : vector<26x20xf32> to vector<26x1xf32>
    %75 = vector.extract_strided_slice %25 {offsets = [8, 0], sizes = [1, 128], strides = [1, 1]} : vector<20x128xf32> to vector<1x128xf32>
    %76 = vector.broadcast %74 : vector<26x1xf32> to vector<26x128xf32>
    %77 = vector.broadcast %75 : vector<1x128xf32> to vector<26x128xf32>
    %78 = arith.mulf %76, %77 : vector<26x128xf32>
    %79 = arith.addf %73, %78 : vector<26x128xf32>
    %80 = vector.extract_strided_slice %2 {offsets = [0, 9], sizes = [26, 1], strides = [1, 1]} : vector<26x20xf32> to vector<26x1xf32>
    %81 = vector.extract_strided_slice %25 {offsets = [9, 0], sizes = [1, 128], strides = [1, 1]} : vector<20x128xf32> to vector<1x128xf32>
    %82 = vector.broadcast %80 : vector<26x1xf32> to vector<26x128xf32>
    %83 = vector.broadcast %81 : vector<1x128xf32> to vector<26x128xf32>
    %84 = arith.mulf %82, %83 : vector<26x128xf32>
    %85 = arith.addf %79, %84 : vector<26x128xf32>
    %86 = vector.extract_strided_slice %2 {offsets = [0, 10], sizes = [26, 1], strides = [1, 1]} : vector<26x20xf32> to vector<26x1xf32>
    %87 = vector.extract_strided_slice %25 {offsets = [10, 0], sizes = [1, 128], strides = [1, 1]} : vector<20x128xf32> to vector<1x128xf32>
    %88 = vector.broadcast %86 : vector<26x1xf32> to vector<26x128xf32>
    %89 = vector.broadcast %87 : vector<1x128xf32> to vector<26x128xf32>
    %90 = arith.mulf %88, %89 : vector<26x128xf32>
    %91 = arith.addf %85, %90 : vector<26x128xf32>
    %92 = vector.extract_strided_slice %2 {offsets = [0, 11], sizes = [26, 1], strides = [1, 1]} : vector<26x20xf32> to vector<26x1xf32>
    %93 = vector.extract_strided_slice %25 {offsets = [11, 0], sizes = [1, 128], strides = [1, 1]} : vector<20x128xf32> to vector<1x128xf32>
    %94 = vector.broadcast %92 : vector<26x1xf32> to vector<26x128xf32>
    %95 = vector.broadcast %93 : vector<1x128xf32> to vector<26x128xf32>
    %96 = arith.mulf %94, %95 : vector<26x128xf32>
    %97 = arith.addf %91, %96 : vector<26x128xf32>
    %98 = vector.extract_strided_slice %2 {offsets = [0, 12], sizes = [26, 1], strides = [1, 1]} : vector<26x20xf32> to vector<26x1xf32>
    %99 = vector.extract_strided_slice %25 {offsets = [12, 0], sizes = [1, 128], strides = [1, 1]} : vector<20x128xf32> to vector<1x128xf32>
    %100 = vector.broadcast %98 : vector<26x1xf32> to vector<26x128xf32>
    %101 = vector.broadcast %99 : vector<1x128xf32> to vector<26x128xf32>
    %102 = arith.mulf %100, %101 : vector<26x128xf32>
    %103 = arith.addf %97, %102 : vector<26x128xf32>
    %104 = vector.extract_strided_slice %2 {offsets = [0, 13], sizes = [26, 1], strides = [1, 1]} : vector<26x20xf32> to vector<26x1xf32>
    %105 = vector.extract_strided_slice %25 {offsets = [13, 0], sizes = [1, 128], strides = [1, 1]} : vector<20x128xf32> to vector<1x128xf32>
    %106 = vector.broadcast %104 : vector<26x1xf32> to vector<26x128xf32>
    %107 = vector.broadcast %105 : vector<1x128xf32> to vector<26x128xf32>
    %108 = arith.mulf %106, %107 : vector<26x128xf32>
    %109 = arith.addf %103, %108 : vector<26x128xf32>
    %110 = vector.extract_strided_slice %2 {offsets = [0, 14], sizes = [26, 1], strides = [1, 1]} : vector<26x20xf32> to vector<26x1xf32>
    %111 = vector.extract_strided_slice %25 {offsets = [14, 0], sizes = [1, 128], strides = [1, 1]} : vector<20x128xf32> to vector<1x128xf32>
    %112 = vector.broadcast %110 : vector<26x1xf32> to vector<26x128xf32>
    %113 = vector.broadcast %111 : vector<1x128xf32> to vector<26x128xf32>
    %114 = arith.mulf %112, %113 : vector<26x128xf32>
    %115 = arith.addf %109, %114 : vector<26x128xf32>
    %116 = vector.extract_strided_slice %2 {offsets = [0, 15], sizes = [26, 1], strides = [1, 1]} : vector<26x20xf32> to vector<26x1xf32>
    %117 = vector.extract_strided_slice %25 {offsets = [15, 0], sizes = [1, 128], strides = [1, 1]} : vector<20x128xf32> to vector<1x128xf32>
    %118 = vector.broadcast %116 : vector<26x1xf32> to vector<26x128xf32>
    %119 = vector.broadcast %117 : vector<1x128xf32> to vector<26x128xf32>
    %120 = arith.mulf %118, %119 : vector<26x128xf32>
    %121 = arith.addf %115, %120 : vector<26x128xf32>
    %122 = vector.extract_strided_slice %2 {offsets = [0, 16], sizes = [26, 1], strides = [1, 1]} : vector<26x20xf32> to vector<26x1xf32>
    %123 = vector.extract_strided_slice %25 {offsets = [16, 0], sizes = [1, 128], strides = [1, 1]} : vector<20x128xf32> to vector<1x128xf32>
    %124 = vector.broadcast %122 : vector<26x1xf32> to vector<26x128xf32>
    %125 = vector.broadcast %123 : vector<1x128xf32> to vector<26x128xf32>
    %126 = arith.mulf %124, %125 : vector<26x128xf32>
    %127 = arith.addf %121, %126 : vector<26x128xf32>
    %128 = vector.extract_strided_slice %2 {offsets = [0, 17], sizes = [26, 1], strides = [1, 1]} : vector<26x20xf32> to vector<26x1xf32>
    %129 = vector.extract_strided_slice %25 {offsets = [17, 0], sizes = [1, 128], strides = [1, 1]} : vector<20x128xf32> to vector<1x128xf32>
    %130 = vector.broadcast %128 : vector<26x1xf32> to vector<26x128xf32>
    %131 = vector.broadcast %129 : vector<1x128xf32> to vector<26x128xf32>
    %132 = arith.mulf %130, %131 : vector<26x128xf32>
    %133 = arith.addf %127, %132 : vector<26x128xf32>
    %134 = vector.extract_strided_slice %2 {offsets = [0, 18], sizes = [26, 1], strides = [1, 1]} : vector<26x20xf32> to vector<26x1xf32>
    %135 = vector.extract_strided_slice %25 {offsets = [18, 0], sizes = [1, 128], strides = [1, 1]} : vector<20x128xf32> to vector<1x128xf32>
    %136 = vector.broadcast %134 : vector<26x1xf32> to vector<26x128xf32>
    %137 = vector.broadcast %135 : vector<1x128xf32> to vector<26x128xf32>
    %138 = arith.mulf %136, %137 : vector<26x128xf32>
    %139 = arith.addf %133, %138 : vector<26x128xf32>
    %140 = vector.extract_strided_slice %2 {offsets = [0, 19], sizes = [26, 1], strides = [1, 1]} : vector<26x20xf32> to vector<26x1xf32>
    %141 = vector.extract_strided_slice %25 {offsets = [19, 0], sizes = [1, 128], strides = [1, 1]} : vector<20x128xf32> to vector<1x128xf32>
    %142 = vector.broadcast %140 : vector<26x1xf32> to vector<26x128xf32>
    %143 = vector.broadcast %141 : vector<1x128xf32> to vector<26x128xf32>
    %144 = arith.mulf %142, %143 : vector<26x128xf32>
    %145 = arith.addf %139, %144 : vector<26x128xf32>
    %146 = vector.broadcast %26 : vector<26x1xf32> to vector<26x128xf32>
    %147 = arith.addf %145, %146 : vector<26x128xf32>
    %148 = math.tanh %147 : vector<26x128xf32>
    %c0_13 = arith.constant 0 : index
    %c0_14 = arith.constant 0 : index
    %149 = vector.load %arg7[%c0_13, %c0_14] : memref<2x1xf32, #tpu.memory_space<vmem>>, vector<2x1xf32>
    %150 = vector.extract_strided_slice %3 {offsets = [0, 0], sizes = [2, 1], strides = [1, 1]} : vector<2x26xf32> to vector<2x1xf32>
    %151 = vector.extract_strided_slice %148 {offsets = [0, 0], sizes = [1, 128], strides = [1, 1]} : vector<26x128xf32> to vector<1x128xf32>
    %152 = vector.broadcast %150 : vector<2x1xf32> to vector<2x128xf32>
    %153 = vector.broadcast %151 : vector<1x128xf32> to vector<2x128xf32>
    %154 = arith.mulf %152, %153 : vector<2x128xf32>
    %155 = vector.extract_strided_slice %3 {offsets = [0, 1], sizes = [2, 1], strides = [1, 1]} : vector<2x26xf32> to vector<2x1xf32>
    %156 = vector.extract_strided_slice %148 {offsets = [1, 0], sizes = [1, 128], strides = [1, 1]} : vector<26x128xf32> to vector<1x128xf32>
    %157 = vector.broadcast %155 : vector<2x1xf32> to vector<2x128xf32>
    %158 = vector.broadcast %156 : vector<1x128xf32> to vector<2x128xf32>
    %159 = arith.mulf %157, %158 : vector<2x128xf32>
    %160 = arith.addf %154, %159 : vector<2x128xf32>
    %161 = vector.extract_strided_slice %3 {offsets = [0, 2], sizes = [2, 1], strides = [1, 1]} : vector<2x26xf32> to vector<2x1xf32>
    %162 = vector.extract_strided_slice %148 {offsets = [2, 0], sizes = [1, 128], strides = [1, 1]} : vector<26x128xf32> to vector<1x128xf32>
    %163 = vector.broadcast %161 : vector<2x1xf32> to vector<2x128xf32>
    %164 = vector.broadcast %162 : vector<1x128xf32> to vector<2x128xf32>
    %165 = arith.mulf %163, %164 : vector<2x128xf32>
    %166 = arith.addf %160, %165 : vector<2x128xf32>
    %167 = vector.extract_strided_slice %3 {offsets = [0, 3], sizes = [2, 1], strides = [1, 1]} : vector<2x26xf32> to vector<2x1xf32>
    %168 = vector.extract_strided_slice %148 {offsets = [3, 0], sizes = [1, 128], strides = [1, 1]} : vector<26x128xf32> to vector<1x128xf32>
    %169 = vector.broadcast %167 : vector<2x1xf32> to vector<2x128xf32>
    %170 = vector.broadcast %168 : vector<1x128xf32> to vector<2x128xf32>
    %171 = arith.mulf %169, %170 : vector<2x128xf32>
    %172 = arith.addf %166, %171 : vector<2x128xf32>
    %173 = vector.extract_strided_slice %3 {offsets = [0, 4], sizes = [2, 1], strides = [1, 1]} : vector<2x26xf32> to vector<2x1xf32>
    %174 = vector.extract_strided_slice %148 {offsets = [4, 0], sizes = [1, 128], strides = [1, 1]} : vector<26x128xf32> to vector<1x128xf32>
    %175 = vector.broadcast %173 : vector<2x1xf32> to vector<2x128xf32>
    %176 = vector.broadcast %174 : vector<1x128xf32> to vector<2x128xf32>
    %177 = arith.mulf %175, %176 : vector<2x128xf32>
    %178 = arith.addf %172, %177 : vector<2x128xf32>
    %179 = vector.extract_strided_slice %3 {offsets = [0, 5], sizes = [2, 1], strides = [1, 1]} : vector<2x26xf32> to vector<2x1xf32>
    %180 = vector.extract_strided_slice %148 {offsets = [5, 0], sizes = [1, 128], strides = [1, 1]} : vector<26x128xf32> to vector<1x128xf32>
    %181 = vector.broadcast %179 : vector<2x1xf32> to vector<2x128xf32>
    %182 = vector.broadcast %180 : vector<1x128xf32> to vector<2x128xf32>
    %183 = arith.mulf %181, %182 : vector<2x128xf32>
    %184 = arith.addf %178, %183 : vector<2x128xf32>
    %185 = vector.extract_strided_slice %3 {offsets = [0, 6], sizes = [2, 1], strides = [1, 1]} : vector<2x26xf32> to vector<2x1xf32>
    %186 = vector.extract_strided_slice %148 {offsets = [6, 0], sizes = [1, 128], strides = [1, 1]} : vector<26x128xf32> to vector<1x128xf32>
    %187 = vector.broadcast %185 : vector<2x1xf32> to vector<2x128xf32>
    %188 = vector.broadcast %186 : vector<1x128xf32> to vector<2x128xf32>
    %189 = arith.mulf %187, %188 : vector<2x128xf32>
    %190 = arith.addf %184, %189 : vector<2x128xf32>
    %191 = vector.extract_strided_slice %3 {offsets = [0, 7], sizes = [2, 1], strides = [1, 1]} : vector<2x26xf32> to vector<2x1xf32>
    %192 = vector.extract_strided_slice %148 {offsets = [7, 0], sizes = [1, 128], strides = [1, 1]} : vector<26x128xf32> to vector<1x128xf32>
    %193 = vector.broadcast %191 : vector<2x1xf32> to vector<2x128xf32>
    %194 = vector.broadcast %192 : vector<1x128xf32> to vector<2x128xf32>
    %195 = arith.mulf %193, %194 : vector<2x128xf32>
    %196 = arith.addf %190, %195 : vector<2x128xf32>
    %197 = vector.extract_strided_slice %3 {offsets = [0, 8], sizes = [2, 1], strides = [1, 1]} : vector<2x26xf32> to vector<2x1xf32>
    %198 = vector.extract_strided_slice %148 {offsets = [8, 0], sizes = [1, 128], strides = [1, 1]} : vector<26x128xf32> to vector<1x128xf32>
    %199 = vector.broadcast %197 : vector<2x1xf32> to vector<2x128xf32>
    %200 = vector.broadcast %198 : vector<1x128xf32> to vector<2x128xf32>
    %201 = arith.mulf %199, %200 : vector<2x128xf32>
    %202 = arith.addf %196, %201 : vector<2x128xf32>
    %203 = vector.extract_strided_slice %3 {offsets = [0, 9], sizes = [2, 1], strides = [1, 1]} : vector<2x26xf32> to vector<2x1xf32>
    %204 = vector.extract_strided_slice %148 {offsets = [9, 0], sizes = [1, 128], strides = [1, 1]} : vector<26x128xf32> to vector<1x128xf32>
    %205 = vector.broadcast %203 : vector<2x1xf32> to vector<2x128xf32>
    %206 = vector.broadcast %204 : vector<1x128xf32> to vector<2x128xf32>
    %207 = arith.mulf %205, %206 : vector<2x128xf32>
    %208 = arith.addf %202, %207 : vector<2x128xf32>
    %209 = vector.extract_strided_slice %3 {offsets = [0, 10], sizes = [2, 1], strides = [1, 1]} : vector<2x26xf32> to vector<2x1xf32>
    %210 = vector.extract_strided_slice %148 {offsets = [10, 0], sizes = [1, 128], strides = [1, 1]} : vector<26x128xf32> to vector<1x128xf32>
    %211 = vector.broadcast %209 : vector<2x1xf32> to vector<2x128xf32>
    %212 = vector.broadcast %210 : vector<1x128xf32> to vector<2x128xf32>
    %213 = arith.mulf %211, %212 : vector<2x128xf32>
    %214 = arith.addf %208, %213 : vector<2x128xf32>
    %215 = vector.extract_strided_slice %3 {offsets = [0, 11], sizes = [2, 1], strides = [1, 1]} : vector<2x26xf32> to vector<2x1xf32>
    %216 = vector.extract_strided_slice %148 {offsets = [11, 0], sizes = [1, 128], strides = [1, 1]} : vector<26x128xf32> to vector<1x128xf32>
    %217 = vector.broadcast %215 : vector<2x1xf32> to vector<2x128xf32>
    %218 = vector.broadcast %216 : vector<1x128xf32> to vector<2x128xf32>
    %219 = arith.mulf %217, %218 : vector<2x128xf32>
    %220 = arith.addf %214, %219 : vector<2x128xf32>
    %221 = vector.extract_strided_slice %3 {offsets = [0, 12], sizes = [2, 1], strides = [1, 1]} : vector<2x26xf32> to vector<2x1xf32>
    %222 = vector.extract_strided_slice %148 {offsets = [12, 0], sizes = [1, 128], strides = [1, 1]} : vector<26x128xf32> to vector<1x128xf32>
    %223 = vector.broadcast %221 : vector<2x1xf32> to vector<2x128xf32>
    %224 = vector.broadcast %222 : vector<1x128xf32> to vector<2x128xf32>
    %225 = arith.mulf %223, %224 : vector<2x128xf32>
    %226 = arith.addf %220, %225 : vector<2x128xf32>
    %227 = vector.extract_strided_slice %3 {offsets = [0, 13], sizes = [2, 1], strides = [1, 1]} : vector<2x26xf32> to vector<2x1xf32>
    %228 = vector.extract_strided_slice %148 {offsets = [13, 0], sizes = [1, 128], strides = [1, 1]} : vector<26x128xf32> to vector<1x128xf32>
    %229 = vector.broadcast %227 : vector<2x1xf32> to vector<2x128xf32>
    %230 = vector.broadcast %228 : vector<1x128xf32> to vector<2x128xf32>
    %231 = arith.mulf %229, %230 : vector<2x128xf32>
    %232 = arith.addf %226, %231 : vector<2x128xf32>
    %233 = vector.extract_strided_slice %3 {offsets = [0, 14], sizes = [2, 1], strides = [1, 1]} : vector<2x26xf32> to vector<2x1xf32>
    %234 = vector.extract_strided_slice %148 {offsets = [14, 0], sizes = [1, 128], strides = [1, 1]} : vector<26x128xf32> to vector<1x128xf32>
    %235 = vector.broadcast %233 : vector<2x1xf32> to vector<2x128xf32>
    %236 = vector.broadcast %234 : vector<1x128xf32> to vector<2x128xf32>
    %237 = arith.mulf %235, %236 : vector<2x128xf32>
    %238 = arith.addf %232, %237 : vector<2x128xf32>
    %239 = vector.extract_strided_slice %3 {offsets = [0, 15], sizes = [2, 1], strides = [1, 1]} : vector<2x26xf32> to vector<2x1xf32>
    %240 = vector.extract_strided_slice %148 {offsets = [15, 0], sizes = [1, 128], strides = [1, 1]} : vector<26x128xf32> to vector<1x128xf32>
    %241 = vector.broadcast %239 : vector<2x1xf32> to vector<2x128xf32>
    %242 = vector.broadcast %240 : vector<1x128xf32> to vector<2x128xf32>
    %243 = arith.mulf %241, %242 : vector<2x128xf32>
    %244 = arith.addf %238, %243 : vector<2x128xf32>
    %245 = vector.extract_strided_slice %3 {offsets = [0, 16], sizes = [2, 1], strides = [1, 1]} : vector<2x26xf32> to vector<2x1xf32>
    %246 = vector.extract_strided_slice %148 {offsets = [16, 0], sizes = [1, 128], strides = [1, 1]} : vector<26x128xf32> to vector<1x128xf32>
    %247 = vector.broadcast %245 : vector<2x1xf32> to vector<2x128xf32>
    %248 = vector.broadcast %246 : vector<1x128xf32> to vector<2x128xf32>
    %249 = arith.mulf %247, %248 : vector<2x128xf32>
    %250 = arith.addf %244, %249 : vector<2x128xf32>
    %251 = vector.extract_strided_slice %3 {offsets = [0, 17], sizes = [2, 1], strides = [1, 1]} : vector<2x26xf32> to vector<2x1xf32>
    %252 = vector.extract_strided_slice %148 {offsets = [17, 0], sizes = [1, 128], strides = [1, 1]} : vector<26x128xf32> to vector<1x128xf32>
    %253 = vector.broadcast %251 : vector<2x1xf32> to vector<2x128xf32>
    %254 = vector.broadcast %252 : vector<1x128xf32> to vector<2x128xf32>
    %255 = arith.mulf %253, %254 : vector<2x128xf32>
    %256 = arith.addf %250, %255 : vector<2x128xf32>
    %257 = vector.extract_strided_slice %3 {offsets = [0, 18], sizes = [2, 1], strides = [1, 1]} : vector<2x26xf32> to vector<2x1xf32>
    %258 = vector.extract_strided_slice %148 {offsets = [18, 0], sizes = [1, 128], strides = [1, 1]} : vector<26x128xf32> to vector<1x128xf32>
    %259 = vector.broadcast %257 : vector<2x1xf32> to vector<2x128xf32>
    %260 = vector.broadcast %258 : vector<1x128xf32> to vector<2x128xf32>
    %261 = arith.mulf %259, %260 : vector<2x128xf32>
    %262 = arith.addf %256, %261 : vector<2x128xf32>
    %263 = vector.extract_strided_slice %3 {offsets = [0, 19], sizes = [2, 1], strides = [1, 1]} : vector<2x26xf32> to vector<2x1xf32>
    %264 = vector.extract_strided_slice %148 {offsets = [19, 0], sizes = [1, 128], strides = [1, 1]} : vector<26x128xf32> to vector<1x128xf32>
    %265 = vector.broadcast %263 : vector<2x1xf32> to vector<2x128xf32>
    %266 = vector.broadcast %264 : vector<1x128xf32> to vector<2x128xf32>
    %267 = arith.mulf %265, %266 : vector<2x128xf32>
    %268 = arith.addf %262, %267 : vector<2x128xf32>
    %269 = vector.extract_strided_slice %3 {offsets = [0, 20], sizes = [2, 1], strides = [1, 1]} : vector<2x26xf32> to vector<2x1xf32>
    %270 = vector.extract_strided_slice %148 {offsets = [20, 0], sizes = [1, 128], strides = [1, 1]} : vector<26x128xf32> to vector<1x128xf32>
    %271 = vector.broadcast %269 : vector<2x1xf32> to vector<2x128xf32>
    %272 = vector.broadcast %270 : vector<1x128xf32> to vector<2x128xf32>
    %273 = arith.mulf %271, %272 : vector<2x128xf32>
    %274 = arith.addf %268, %273 : vector<2x128xf32>
    %275 = vector.extract_strided_slice %3 {offsets = [0, 21], sizes = [2, 1], strides = [1, 1]} : vector<2x26xf32> to vector<2x1xf32>
    %276 = vector.extract_strided_slice %148 {offsets = [21, 0], sizes = [1, 128], strides = [1, 1]} : vector<26x128xf32> to vector<1x128xf32>
    %277 = vector.broadcast %275 : vector<2x1xf32> to vector<2x128xf32>
    %278 = vector.broadcast %276 : vector<1x128xf32> to vector<2x128xf32>
    %279 = arith.mulf %277, %278 : vector<2x128xf32>
    %280 = arith.addf %274, %279 : vector<2x128xf32>
    %281 = vector.extract_strided_slice %3 {offsets = [0, 22], sizes = [2, 1], strides = [1, 1]} : vector<2x26xf32> to vector<2x1xf32>
    %282 = vector.extract_strided_slice %148 {offsets = [22, 0], sizes = [1, 128], strides = [1, 1]} : vector<26x128xf32> to vector<1x128xf32>
    %283 = vector.broadcast %281 : vector<2x1xf32> to vector<2x128xf32>
    %284 = vector.broadcast %282 : vector<1x128xf32> to vector<2x128xf32>
    %285 = arith.mulf %283, %284 : vector<2x128xf32>
    %286 = arith.addf %280, %285 : vector<2x128xf32>
    %287 = vector.extract_strided_slice %3 {offsets = [0, 23], sizes = [2, 1], strides = [1, 1]} : vector<2x26xf32> to vector<2x1xf32>
    %288 = vector.extract_strided_slice %148 {offsets = [23, 0], sizes = [1, 128], strides = [1, 1]} : vector<26x128xf32> to vector<1x128xf32>
    %289 = vector.broadcast %287 : vector<2x1xf32> to vector<2x128xf32>
    %290 = vector.broadcast %288 : vector<1x128xf32> to vector<2x128xf32>
    %291 = arith.mulf %289, %290 : vector<2x128xf32>
    %292 = arith.addf %286, %291 : vector<2x128xf32>
    %293 = vector.extract_strided_slice %3 {offsets = [0, 24], sizes = [2, 1], strides = [1, 1]} : vector<2x26xf32> to vector<2x1xf32>
    %294 = vector.extract_strided_slice %148 {offsets = [24, 0], sizes = [1, 128], strides = [1, 1]} : vector<26x128xf32> to vector<1x128xf32>
    %295 = vector.broadcast %293 : vector<2x1xf32> to vector<2x128xf32>
    %296 = vector.broadcast %294 : vector<1x128xf32> to vector<2x128xf32>
    %297 = arith.mulf %295, %296 : vector<2x128xf32>
    %298 = arith.addf %292, %297 : vector<2x128xf32>
    %299 = vector.extract_strided_slice %3 {offsets = [0, 25], sizes = [2, 1], strides = [1, 1]} : vector<2x26xf32> to vector<2x1xf32>
    %300 = vector.extract_strided_slice %148 {offsets = [25, 0], sizes = [1, 128], strides = [1, 1]} : vector<26x128xf32> to vector<1x128xf32>
    %301 = vector.broadcast %299 : vector<2x1xf32> to vector<2x128xf32>
    %302 = vector.broadcast %300 : vector<1x128xf32> to vector<2x128xf32>
    %303 = arith.mulf %301, %302 : vector<2x128xf32>
    %304 = arith.addf %298, %303 : vector<2x128xf32>
    %305 = vector.broadcast %149 : vector<2x1xf32> to vector<2x128xf32>
    %306 = arith.addf %304, %305 : vector<2x128xf32>
    %307 = math.tanh %306 : vector<2x128xf32>
    %c0_15 = arith.constant 0 : index
    %c0_16 = arith.constant 0 : index
    %308 = vector.load %arg9[%c0_15, %c0_16] : memref<1x1xf32, #tpu.memory_space<vmem>>, vector<1x1xf32>
    %309 = vector.extract_strided_slice %4 {offsets = [0, 0], sizes = [1, 1], strides = [1, 1]} : vector<1x2xf32> to vector<1x1xf32>
    %310 = vector.extract_strided_slice %307 {offsets = [0, 0], sizes = [1, 128], strides = [1, 1]} : vector<2x128xf32> to vector<1x128xf32>
    %311 = vector.broadcast %309 : vector<1x1xf32> to vector<1x128xf32>
    %312 = arith.mulf %311, %310 : vector<1x128xf32>
    %313 = vector.extract_strided_slice %4 {offsets = [0, 1], sizes = [1, 1], strides = [1, 1]} : vector<1x2xf32> to vector<1x1xf32>
    %314 = vector.extract_strided_slice %307 {offsets = [1, 0], sizes = [1, 128], strides = [1, 1]} : vector<2x128xf32> to vector<1x128xf32>
    %315 = vector.broadcast %313 : vector<1x1xf32> to vector<1x128xf32>
    %316 = arith.mulf %315, %314 : vector<1x128xf32>
    %317 = arith.addf %312, %316 : vector<1x128xf32>
    %318 = vector.broadcast %308 : vector<1x1xf32> to vector<1x128xf32>
    %319 = arith.addf %317, %318 : vector<1x128xf32>
    %c0_17 = arith.constant 0 : index
    %c0_18 = arith.constant 0 : index
    %320 = vector.load %arg10[%c0_17, %c0_18] : memref<1x128xf32, #tpu.memory_space<vmem>>, vector<1x128xf32>
    tpu.vector_store %arg10[%c0_17, %c0_18], %319 {strides = array<i32>} : memref<1x128xf32, #tpu.memory_space<vmem>>, vector<1x128xf32>,
    return
  }
  func.func @transform_0(%arg0: i32) -> (i32, i32) {
    %c0_i32 = arith.constant 0 : i32
    %c0_i32_0 = arith.constant 0 : i32
    return %c0_i32, %arg0 : i32, i32
  }
  func.func @transform_1(%arg0: i32) -> (i32, i32) {
    %c0_i32 = arith.constant 0 : i32
    %c0_i32_0 = arith.constant 0 : i32
    %c0_i32_1 = arith.constant 0 : i32
    return %c0_i32, %c0_i32_0 : i32, i32
  }
  func.func @transform_2(%arg0: i32) -> (i32, i32) {
    %c0_i32 = arith.constant 0 : i32
    %c0_i32_0 = arith.constant 0 : i32
    %c0_i32_1 = arith.constant 0 : i32
    return %c0_i32, %c0_i32_0 : i32, i32
  }
  func.func @transform_3(%arg0: i32) -> (i32, i32) {
    %c0_i32 = arith.constant 0 : i32
    %c0_i32_0 = arith.constant 0 : i32
    %c0_i32_1 = arith.constant 0 : i32
    return %c0_i32, %c0_i32_0 : i32, i32
  }
  func.func @transform_4(%arg0: i32) -> (i32, i32) {
    %c0_i32 = arith.constant 0 : i32
    %c0_i32_0 = arith.constant 0 : i32
    %c0_i32_1 = arith.constant 0 : i32
    return %c0_i32, %c0_i32_0 : i32, i32
  }
  func.func @transform_5(%arg0: i32) -> (i32, i32) {
    %c0_i32 = arith.constant 0 : i32
    %c0_i32_0 = arith.constant 0 : i32
    %c0_i32_1 = arith.constant 0 : i32
    return %c0_i32, %c0_i32_0 : i32, i32
  }
  func.func @transform_6(%arg0: i32) -> (i32, i32) {
    %c0_i32 = arith.constant 0 : i32
    %c0_i32_0 = arith.constant 0 : i32
    %c0_i32_1 = arith.constant 0 : i32
    return %c0_i32, %c0_i32_0 : i32, i32
  }
  func.func @transform_7(%arg0: i32) -> (i32, i32) {
    %c0_i32 = arith.constant 0 : i32
    %c0_i32_0 = arith.constant 0 : i32
    %c0_i32_1 = arith.constant 0 : i32
    return %c0_i32, %c0_i32_0 : i32, i32
  }
  func.func @transform_8(%arg0: i32) -> (i32, i32) {
    %c0_i32 = arith.constant 0 : i32
    %c0_i32_0 = arith.constant 0 : i32
    %c0_i32_1 = arith.constant 0 : i32
    return %c0_i32, %c0_i32_0 : i32, i32
  }
  func.func @transform_9(%arg0: i32) -> (i32, i32) {
    %c0_i32 = arith.constant 0 : i32
    %c0_i32_0 = arith.constant 0 : i32
    return %c0_i32, %arg0 : i32, i32
  }
}

</mosaic_0001>

<llo_original>
// kernel: tpu_custom_call.1
$region0: #{tpu_custom_call.1}
  #allocation0 [shape = 'u32[]', space=smem, size = 0x4, offset = 0x4, fixed_abs, tag = 'smem constant byte address 0x4 - core index']
  #allocation1 [shape = 'u32[144,128]{1,0:T(1,128)}', space=vmem, size = 0x12000, scoped, tag = 'internal scratch']
  #allocation2 [shape = 'f32[1,1]{1,0:T(1,128)S(1)}', space=vmem, size = 0x200, scoped, tag = 'scoped memory for tpu_custom_call.1']
  %s0 = inlined_call_operand.vmem [shape: f32[3,128], index: 0, kind: input, shape index: {}]
  %s1 = inlined_call_operand.vmem [shape: f32[20,3], index: 1, kind: input, shape index: {}]
  %s2 = inlined_call_operand.vmem [shape: f32[20,1], index: 2, kind: input, shape index: {}]
  %s3 = inlined_call_operand.vmem [shape: f32[26,20], index: 3, kind: input, shape index: {}]
  %s4 = inlined_call_operand.vmem [shape: f32[26,1], index: 4, kind: input, shape index: {}]
  %s5 = inlined_call_operand.vmem [shape: f32[2,26], index: 5, kind: input, shape index: {}]
  %s6 = inlined_call_operand.vmem [shape: f32[2,1], index: 6, kind: input, shape index: {}]
  %s7 = inlined_call_operand.vmem [shape: f32[1,2], index: 7, kind: input, shape index: {}]
  %s8 = inlined_call_operand.<no memory space> [shape: f32[1,1], index: 8, kind: input, shape index: {}]
  %s9 = inlined_call_operand.hbm [shape: f32[1,128], index: 9, kind: output, shape index: {}]
  %s10 = sld [smem:[#allocation0]]
  $region46: #{tpu_custom_call.1} parent=0
    _
  %s12 = ssub.s32 1, %s10
  %s13 = scalar_select 0, %s12, %s10
  %v14 = vstv %s8
  %15 = vst [vmem:[#allocation2] sm:$0x1] %v14
  $region1: #{tpu_custom_call.1} parent=0
    #allocation3 [shape = 'u8[512]{0}', space=vmem, size = 0x400, scoped, tag = 'output window, operand 0, single buffered']
    #allocation4 [shape = 's32[1]{0}', space=sflag, size = 0x4, scoped, tag = 'scoped memory for tpu_custom_call.1']
    %16 = vsyncpa [#allocation4], 0
    // Predicated region
    $region2: #{tpu_custom_call.1} parent=1 // pred_check
      _
    $region3: #{tpu_custom_call.1} parent=1 // pred_check_branch
      %18 = sbr.rel (0) target = $region5
    $region4: #{tpu_custom_call.1} parent=1 // pred_region
      _
    $region5: #{tpu_custom_call.1} parent=1 // pred_fallthru
      _
    // Predicated region
    $region6: #{tpu_custom_call.1} parent=1 // pred_check
      _
    $region7: #{tpu_custom_call.1} parent=1 // pred_check_branch
      %20 = sbr.rel (0) target = $region9
    $region8: #{tpu_custom_call.1} parent=1 // pred_region
      _
    $region9: #{tpu_custom_call.1} parent=1 // pred_fallthru
      _
    // Predicated region
    $region10: #{tpu_custom_call.1} parent=1 // pred_check
      _
    $region11: #{tpu_custom_call.1} parent=1 // pred_check_branch
      %22 = sbr.rel (0) target = $region13
    $region12: #{tpu_custom_call.1} parent=1 // pred_region
      _
    $region13: #{tpu_custom_call.1} parent=1 // pred_fallthru
      _
    // Predicated region
    $region14: #{tpu_custom_call.1} parent=1 // pred_check
      _
    $region15: #{tpu_custom_call.1} parent=1 // pred_check_branch
      %24 = sbr.rel (0) target = $region17
    $region16: #{tpu_custom_call.1} parent=1 // pred_region
      _
    $region17: #{tpu_custom_call.1} parent=1 // pred_fallthru
      _
    // Predicated region
    $region18: #{tpu_custom_call.1} parent=1 // pred_check
      _
    $region19: #{tpu_custom_call.1} parent=1 // pred_check_branch
      %26 = sbr.rel (0) target = $region21
    $region20: #{tpu_custom_call.1} parent=1 // pred_region
      _
    $region21: #{tpu_custom_call.1} parent=1 // pred_fallthru
      _
    // Predicated region
    $region22: #{tpu_custom_call.1} parent=1 // pred_check
      _
    $region23: #{tpu_custom_call.1} parent=1 // pred_check_branch
      %28 = sbr.rel (0) target = $region25
    $region24: #{tpu_custom_call.1} parent=1 // pred_region
      _
    $region25: #{tpu_custom_call.1} parent=1 // pred_fallthru
      _
    // Predicated region
    $region26: #{tpu_custom_call.1} parent=1 // pred_check
      _
    $region27: #{tpu_custom_call.1} parent=1 // pred_check_branch
      %30 = sbr.rel (0) target = $region29
    $region28: #{tpu_custom_call.1} parent=1 // pred_region
      _
    $region29: #{tpu_custom_call.1} parent=1 // pred_fallthru
      _
    // Predicated region
    $region30: #{tpu_custom_call.1} parent=1 // pred_check
      _
    $region31: #{tpu_custom_call.1} parent=1 // pred_check_branch
      %32 = sbr.rel (0) target = $region33
    $region32: #{tpu_custom_call.1} parent=1 // pred_region
      _
    $region33: #{tpu_custom_call.1} parent=1 // pred_fallthru
      _
    // Predicated region
    $region34: #{tpu_custom_call.1} parent=1 // pred_check
      _
    $region35: #{tpu_custom_call.1} parent=1 // pred_check_branch
      %34 = sbr.rel (0) target = $region37
    $region36: #{tpu_custom_call.1} parent=1 // pred_region
      _
    $region37: #{tpu_custom_call.1} parent=1 // pred_fallthru
      _
    %v35 = vld [vmem:[%s0] sm:$0x7]
    %v36 = vld [vmem:[%s1] sm:$0xff]
    %v37 = vld [vmem:[%s1 + $0x8] sm:$0xff]
    %v38 = vld [vmem:[%s1 + $0x10] sm:$0xf]
    %v39 = vld [vmem:[%s3] sm:$0xff]
    %v40 = vld [vmem:[%s3 + $0x8] sm:$0xff]
    %v41 = vld [vmem:[%s3 + $0x10] sm:$0xff]
    %v42 = vld [vmem:[%s3 + $0x18] sm:$0x3]
    %v43 = vld [vmem:[%s5] sm:$0x3]
    %v44 = vld [vmem:[%s7] sm:$0x1]
    %v45 = vld [vmem:[%s2] sm:$0xff]
    %v46 = vld [vmem:[%s2 + $0x8] sm:$0xff]
    %v47 = vld [vmem:[%s2 + $0x10] sm:$0xf]
    %49 = vset.pattern.permute.xlu0 0
    %50 = vperm.xlu0 %49, %v36
    %v51 = vpop.permute.xlu0 %50
    %54 = vset.pattern.permute.xlu0 0
    %55 = vperm.xlu0 %54, %v37
    %v56 = vpop.permute.xlu0 %55
    %59 = vset.pattern.permute.xlu0 0
    %60 = vperm.xlu0 %59, %v38
    %v61 = vpop.permute.xlu0 %60
    %v63 = vlaneseq
    %v64 = vshrl.u32 %v63, 7
    %v65 = vsub.s32 0, %v64
    %v66 = vrot.slane %v35, %v65
    %v67 = vmul.f32 %v51, %v66
    %v68 = vmul.f32 %v56, %v66
    %v69 = vmul.f32 %v61, %v66
    %70 = vset.pattern.permute.xlu0 1
    %71 = vperm.xlu0 %70, %v36
    %v72 = vpop.permute.xlu0 %71
    %74 = vset.pattern.permute.xlu0 1
    %75 = vperm.xlu0 %74, %v37
    %v76 = vpop.permute.xlu0 %75
    %78 = vset.pattern.permute.xlu0 1
    %79 = vperm.xlu0 %78, %v38
    %v80 = vpop.permute.xlu0 %79
    %v82 = vlaneseq
    %v83 = vshrl.u32 %v82, 7
    %v84 = vsub.s32 1, %v83
    %v85 = vrot.slane %v35, %v84
    %v86 = vmul.f32 %v72, %v85
    %v87 = vmul.f32 %v76, %v85
    %v88 = vmul.f32 %v80, %v85
    %v89 = vadd.f32 %v67, %v86
    %v90 = vadd.f32 %v68, %v87
    %v91 = vadd.f32 %v69, %v88
    %92 = vset.pattern.permute.xlu0 2
    %93 = vperm.xlu0 %92, %v36
    %v94 = vpop.permute.xlu0 %93
    %96 = vset.pattern.permute.xlu0 2
    %97 = vperm.xlu0 %96, %v37
    %v98 = vpop.permute.xlu0 %97
    %100 = vset.pattern.permute.xlu0 2
    %101 = vperm.xlu0 %100, %v38
    %v102 = vpop.permute.xlu0 %101
    %v104 = vlaneseq
    %v105 = vshrl.u32 %v104, 7
    %v106 = vsub.s32 2, %v105
    %v107 = vrot.slane %v35, %v106
    %v108 = vmul.f32 %v94, %v107
    %v109 = vmul.f32 %v98, %v107
    %v110 = vmul.f32 %v102, %v107
    %v111 = vadd.f32 %v89, %v108
    %v112 = vadd.f32 %v90, %v109
    %v113 = vadd.f32 %v91, %v110
    %115 = vset.pattern.permute.xlu0 0
    %116 = vperm.xlu0 %115, %v45
    %v117 = vpop.permute.xlu0 %116
    %120 = vset.pattern.permute.xlu0 0
    %121 = vperm.xlu0 %120, %v46
    %v122 = vpop.permute.xlu0 %121
    %125 = vset.pattern.permute.xlu0 0
    %126 = vperm.xlu0 %125, %v47
    %v127 = vpop.permute.xlu0 %126
    %v129 = vadd.f32 %v111, %v117
    %v130 = vadd.f32 %v112, %v122
    %v131 = vadd.f32 %v113, %v127
    %v132 = vtanh.pop %v129
    %v133 = vtanh.pop %v130
    %v134 = vtanh.pop %v131
    %v135 = vld [vmem:[%s4] sm:$0xff]
    %v136 = vld [vmem:[%s4 + $0x8] sm:$0xff]
    %v137 = vld [vmem:[%s4 + $0x10] sm:$0xff]
    %v138 = vld [vmem:[%s4 + $0x18] sm:$0x3]
    %140 = vset.pattern.permute.xlu0 0
    %141 = vperm.xlu0 %140, %v39
    %v142 = vpop.permute.xlu0 %141
    %145 = vset.pattern.permute.xlu0 0
    %146 = vperm.xlu0 %145, %v40
    %v147 = vpop.permute.xlu0 %146
    %150 = vset.pattern.permute.xlu0 0
    %151 = vperm.xlu0 %150, %v41
    %v152 = vpop.permute.xlu0 %151
    %155 = vset.pattern.permute.xlu0 0
    %156 = vperm.xlu0 %155, %v42
    %v157 = vpop.permute.xlu0 %156
    %v159 = vlaneseq
    %v160 = vshrl.u32 %v159, 7
    %v161 = vsub.s32 0, %v160
    %v162 = vrot.slane %v132, %v161
    %v163 = vmul.f32 %v142, %v162
    %v164 = vmul.f32 %v147, %v162
    %v165 = vmul.f32 %v152, %v162
    %v166 = vmul.f32 %v157, %v162
    %167 = vset.pattern.permute.xlu0 1
    %168 = vperm.xlu0 %167, %v39
    %v169 = vpop.permute.xlu0 %168
    %171 = vset.pattern.permute.xlu0 1
    %172 = vperm.xlu0 %171, %v40
    %v173 = vpop.permute.xlu0 %172
    %175 = vset.pattern.permute.xlu0 1
    %176 = vperm.xlu0 %175, %v41
    %v177 = vpop.permute.xlu0 %176
    %179 = vset.pattern.permute.xlu0 1
    %180 = vperm.xlu0 %179, %v42
    %v181 = vpop.permute.xlu0 %180
    %v183 = vlaneseq
    %v184 = vshrl.u32 %v183, 7
    %v185 = vsub.s32 1, %v184
    %v186 = vrot.slane %v132, %v185
    %v187 = vmul.f32 %v169, %v186
    %v188 = vmul.f32 %v173, %v186
    %v189 = vmul.f32 %v177, %v186
    %v190 = vmul.f32 %v181, %v186
    %v191 = vadd.f32 %v163, %v187
    %v192 = vadd.f32 %v164, %v188
    %v193 = vadd.f32 %v165, %v189
    %v194 = vadd.f32 %v166, %v190
    %195 = vset.pattern.permute.xlu0 2
    %196 = vperm.xlu0 %195, %v39
    %v197 = vpop.permute.xlu0 %196
    %199 = vset.pattern.permute.xlu0 2
    %200 = vperm.xlu0 %199, %v40
    %v201 = vpop.permute.xlu0 %200
    %203 = vset.pattern.permute.xlu0 2
    %204 = vperm.xlu0 %203, %v41
    %v205 = vpop.permute.xlu0 %204
    %207 = vset.pattern.permute.xlu0 2
    %208 = vperm.xlu0 %207, %v42
    %v209 = vpop.permute.xlu0 %208
    %v211 = vlaneseq
    %v212 = vshrl.u32 %v211, 7
    %v213 = vsub.s32 2, %v212
    %v214 = vrot.slane %v132, %v213
    %v215 = vmul.f32 %v197, %v214
    %v216 = vmul.f32 %v201, %v214
    %v217 = vmul.f32 %v205, %v214
    %v218 = vmul.f32 %v209, %v214
    %v219 = vadd.f32 %v191, %v215
    %v220 = vadd.f32 %v192, %v216
    %v221 = vadd.f32 %v193, %v217
    %v222 = vadd.f32 %v194, %v218
    %223 = vset.pattern.permute.xlu0 3
    %224 = vperm.xlu0 %223, %v39
    %v225 = vpop.permute.xlu0 %224
    %227 = vset.pattern.permute.xlu0 3
    %228 = vperm.xlu0 %227, %v40
    %v229 = vpop.permute.xlu0 %228
    %231 = vset.pattern.permute.xlu0 3
    %232 = vperm.xlu0 %231, %v41
    %v233 = vpop.permute.xlu0 %232
    %235 = vset.pattern.permute.xlu0 3
    %236 = vperm.xlu0 %235, %v42
    %v237 = vpop.permute.xlu0 %236
    %v239 = vlaneseq
    %v240 = vshrl.u32 %v239, 7
    %v241 = vsub.s32 3, %v240
    %v242 = vrot.slane %v132, %v241
    %v243 = vmul.f32 %v225, %v242
    %v244 = vmul.f32 %v229, %v242
    %v245 = vmul.f32 %v233, %v242
    %v246 = vmul.f32 %v237, %v242
    %v247 = vadd.f32 %v219, %v243
    %v248 = vadd.f32 %v220, %v244
    %v249 = vadd.f32 %v221, %v245
    %v250 = vadd.f32 %v222, %v246
    %251 = vset.pattern.permute.xlu0 4
    %252 = vperm.xlu0 %251, %v39
    %v253 = vpop.permute.xlu0 %252
    %255 = vset.pattern.permute.xlu0 4
    %256 = vperm.xlu0 %255, %v40
    %v257 = vpop.permute.xlu0 %256
    %259 = vset.pattern.permute.xlu0 4
    %260 = vperm.xlu0 %259, %v41
    %v261 = vpop.permute.xlu0 %260
    %263 = vset.pattern.permute.xlu0 4
    %264 = vperm.xlu0 %263, %v42
    %v265 = vpop.permute.xlu0 %264
    %v267 = vlaneseq
    %v268 = vshrl.u32 %v267, 7
    %v269 = vsub.s32 4, %v268
    %v270 = vrot.slane %v132, %v269
    %v271 = vmul.f32 %v253, %v270
    %v272 = vmul.f32 %v257, %v270
    %v273 = vmul.f32 %v261, %v270
    %v274 = vmul.f32 %v265, %v270
    %v275 = vadd.f32 %v247, %v271
    %v276 = vadd.f32 %v248, %v272
    %v277 = vadd.f32 %v249, %v273
    %v278 = vadd.f32 %v250, %v274
    %279 = vset.pattern.permute.xlu0 5
    %280 = vperm.xlu0 %279, %v39
    %v281 = vpop.permute.xlu0 %280
    %283 = vset.pattern.permute.xlu0 5
    %284 = vperm.xlu0 %283, %v40
    %v285 = vpop.permute.xlu0 %284
    %287 = vset.pattern.permute.xlu0 5
    %288 = vperm.xlu0 %287, %v41
    %v289 = vpop.permute.xlu0 %288
    %291 = vset.pattern.permute.xlu0 5
    %292 = vperm.xlu0 %291, %v42
    %v293 = vpop.permute.xlu0 %292
    %v295 = vlaneseq
    %v296 = vshrl.u32 %v295, 7
    %v297 = vsub.s32 5, %v296
    %v298 = vrot.slane %v132, %v297
    %v299 = vmul.f32 %v281, %v298
    %v300 = vmul.f32 %v285, %v298
    %v301 = vmul.f32 %v289, %v298
    %v302 = vmul.f32 %v293, %v298
    %v303 = vadd.f32 %v275, %v299
    %v304 = vadd.f32 %v276, %v300
    %v305 = vadd.f32 %v277, %v301
    %v306 = vadd.f32 %v278, %v302
    %307 = vset.pattern.permute.xlu0 6
    %308 = vperm.xlu0 %307, %v39
    %v309 = vpop.permute.xlu0 %308
    %311 = vset.pattern.permute.xlu0 6
    %312 = vperm.xlu0 %311, %v40
    %v313 = vpop.permute.xlu0 %312
    %315 = vset.pattern.permute.xlu0 6
    %316 = vperm.xlu0 %315, %v41
    %v317 = vpop.permute.xlu0 %316
    %319 = vset.pattern.permute.xlu0 6
    %320 = vperm.xlu0 %319, %v42
    %v321 = vpop.permute.xlu0 %320
    %v323 = vlaneseq
    %v324 = vshrl.u32 %v323, 7
    %v325 = vsub.s32 6, %v324
    %v326 = vrot.slane %v132, %v325
    %v327 = vmul.f32 %v309, %v326
    %v328 = vmul.f32 %v313, %v326
    %v329 = vmul.f32 %v317, %v326
    %v330 = vmul.f32 %v321, %v326
    %v331 = vadd.f32 %v303, %v327
    %v332 = vadd.f32 %v304, %v328
    %v333 = vadd.f32 %v305, %v329
    %v334 = vadd.f32 %v306, %v330
    %335 = vset.pattern.permute.xlu0 7
    %336 = vperm.xlu0 %335, %v39
    %v337 = vpop.permute.xlu0 %336
    %339 = vset.pattern.permute.xlu0 7
    %340 = vperm.xlu0 %339, %v40
    %v341 = vpop.permute.xlu0 %340
    %343 = vset.pattern.permute.xlu0 7
    %344 = vperm.xlu0 %343, %v41
    %v345 = vpop.permute.xlu0 %344
    %347 = vset.pattern.permute.xlu0 7
    %348 = vperm.xlu0 %347, %v42
    %v349 = vpop.permute.xlu0 %348
    %v351 = vlaneseq
    %v352 = vshrl.u32 %v351, 7
    %v353 = vsub.s32 7, %v352
    %v354 = vrot.slane %v132, %v353
    %v355 = vmul.f32 %v337, %v354
    %v356 = vmul.f32 %v341, %v354
    %v357 = vmul.f32 %v345, %v354
    %v358 = vmul.f32 %v349, %v354
    %v359 = vadd.f32 %v331, %v355
    %v360 = vadd.f32 %v332, %v356
    %v361 = vadd.f32 %v333, %v357
    %v362 = vadd.f32 %v334, %v358
    %363 = vset.pattern.permute.xlu0 8
    %364 = vperm.xlu0 %363, %v39
    %v365 = vpop.permute.xlu0 %364
    %367 = vset.pattern.permute.xlu0 8
    %368 = vperm.xlu0 %367, %v40
    %v369 = vpop.permute.xlu0 %368
    %371 = vset.pattern.permute.xlu0 8
    %372 = vperm.xlu0 %371, %v41
    %v373 = vpop.permute.xlu0 %372
    %375 = vset.pattern.permute.xlu0 8
    %376 = vperm.xlu0 %375, %v42
    %v377 = vpop.permute.xlu0 %376
    %v379 = vlaneseq
    %v380 = vshrl.u32 %v379, 7
    %v381 = vsub.s32 0, %v380
    %v382 = vrot.slane %v133, %v381
    %v383 = vmul.f32 %v365, %v382
    %v384 = vmul.f32 %v369, %v382
    %v385 = vmul.f32 %v373, %v382
    %v386 = vmul.f32 %v377, %v382
    %v387 = vadd.f32 %v359, %v383
    %v388 = vadd.f32 %v360, %v384
    %v389 = vadd.f32 %v361, %v385
    %v390 = vadd.f32 %v362, %v386
    %391 = vset.pattern.permute.xlu0 9
    %392 = vperm.xlu0 %391, %v39
    %v393 = vpop.permute.xlu0 %392
    %395 = vset.pattern.permute.xlu0 9
    %396 = vperm.xlu0 %395, %v40
    %v397 = vpop.permute.xlu0 %396
    %399 = vset.pattern.permute.xlu0 9
    %400 = vperm.xlu0 %399, %v41
    %v401 = vpop.permute.xlu0 %400
    %403 = vset.pattern.permute.xlu0 9
    %404 = vperm.xlu0 %403, %v42
    %v405 = vpop.permute.xlu0 %404
    %v407 = vlaneseq
    %v408 = vshrl.u32 %v407, 7
    %v409 = vsub.s32 1, %v408
    %v410 = vrot.slane %v133, %v409
    %v411 = vmul.f32 %v393, %v410
    %v412 = vmul.f32 %v397, %v410
    %v413 = vmul.f32 %v401, %v410
    %v414 = vmul.f32 %v405, %v410
    %v415 = vadd.f32 %v387, %v411
    %v416 = vadd.f32 %v388, %v412
    %v417 = vadd.f32 %v389, %v413
    %v418 = vadd.f32 %v390, %v414
    %419 = vset.pattern.permute.xlu0 10
    %420 = vperm.xlu0 %419, %v39
    %v421 = vpop.permute.xlu0 %420
    %423 = vset.pattern.permute.xlu0 10
    %424 = vperm.xlu0 %423, %v40
    %v425 = vpop.permute.xlu0 %424
    %427 = vset.pattern.permute.xlu0 10
    %428 = vperm.xlu0 %427, %v41
    %v429 = vpop.permute.xlu0 %428
    %431 = vset.pattern.permute.xlu0 10
    %432 = vperm.xlu0 %431, %v42
    %v433 = vpop.permute.xlu0 %432
    %v435 = vlaneseq
    %v436 = vshrl.u32 %v435, 7
    %v437 = vsub.s32 2, %v436
    %v438 = vrot.slane %v133, %v437
    %v439 = vmul.f32 %v421, %v438
    %v440 = vmul.f32 %v425, %v438
    %v441 = vmul.f32 %v429, %v438
    %v442 = vmul.f32 %v433, %v438
    %v443 = vadd.f32 %v415, %v439
    %v444 = vadd.f32 %v416, %v440
    %v445 = vadd.f32 %v417, %v441
    %v446 = vadd.f32 %v418, %v442
    %447 = vset.pattern.permute.xlu0 11
    %448 = vperm.xlu0 %447, %v39
    %v449 = vpop.permute.xlu0 %448
    %451 = vset.pattern.permute.xlu0 11
    %452 = vperm.xlu0 %451, %v40
    %v453 = vpop.permute.xlu0 %452
    %455 = vset.pattern.permute.xlu0 11
    %456 = vperm.xlu0 %455, %v41
    %v457 = vpop.permute.xlu0 %456
    %459 = vset.pattern.permute.xlu0 11
    %460 = vperm.xlu0 %459, %v42
    %v461 = vpop.permute.xlu0 %460
    %v463 = vlaneseq
    %v464 = vshrl.u32 %v463, 7
    %v465 = vsub.s32 3, %v464
    %v466 = vrot.slane %v133, %v465
    %v467 = vmul.f32 %v449, %v466
    %v468 = vmul.f32 %v453, %v466
    %v469 = vmul.f32 %v457, %v466
    %v470 = vmul.f32 %v461, %v466
    %v471 = vadd.f32 %v443, %v467
    %v472 = vadd.f32 %v444, %v468
    %v473 = vadd.f32 %v445, %v469
    %v474 = vadd.f32 %v446, %v470
    %475 = vset.pattern.permute.xlu0 12
    %476 = vperm.xlu0 %475, %v39
    %v477 = vpop.permute.xlu0 %476
    %479 = vset.pattern.permute.xlu0 12
    %480 = vperm.xlu0 %479, %v40
    %v481 = vpop.permute.xlu0 %480
    %483 = vset.pattern.permute.xlu0 12
    %484 = vperm.xlu0 %483, %v41
    %v485 = vpop.permute.xlu0 %484
    %487 = vset.pattern.permute.xlu0 12
    %488 = vperm.xlu0 %487, %v42
    %v489 = vpop.permute.xlu0 %488
    %v491 = vlaneseq
    %v492 = vshrl.u32 %v491, 7
    %v493 = vsub.s32 4, %v492
    %v494 = vrot.slane %v133, %v493
    %v495 = vmul.f32 %v477, %v494
    %v496 = vmul.f32 %v481, %v494
    %v497 = vmul.f32 %v485, %v494
    %v498 = vmul.f32 %v489, %v494
    %v499 = vadd.f32 %v471, %v495
    %v500 = vadd.f32 %v472, %v496
    %v501 = vadd.f32 %v473, %v497
    %v502 = vadd.f32 %v474, %v498
    %503 = vset.pattern.permute.xlu0 13
    %504 = vperm.xlu0 %503, %v39
    %v505 = vpop.permute.xlu0 %504
    %507 = vset.pattern.permute.xlu0 13
    %508 = vperm.xlu0 %507, %v40
    %v509 = vpop.permute.xlu0 %508
    %511 = vset.pattern.permute.xlu0 13
    %512 = vperm.xlu0 %511, %v41
    %v513 = vpop.permute.xlu0 %512
    %515 = vset.pattern.permute.xlu0 13
    %516 = vperm.xlu0 %515, %v42
    %v517 = vpop.permute.xlu0 %516
    %v519 = vlaneseq
    %v520 = vshrl.u32 %v519, 7
    %v521 = vsub.s32 5, %v520
    %v522 = vrot.slane %v133, %v521
    %v523 = vmul.f32 %v505, %v522
    %v524 = vmul.f32 %v509, %v522
    %v525 = vmul.f32 %v513, %v522
    %v526 = vmul.f32 %v517, %v522
    %v527 = vadd.f32 %v499, %v523
    %v528 = vadd.f32 %v500, %v524
    %v529 = vadd.f32 %v501, %v525
    %v530 = vadd.f32 %v502, %v526
    %531 = vset.pattern.permute.xlu0 14
    %532 = vperm.xlu0 %531, %v39
    %v533 = vpop.permute.xlu0 %532
    %535 = vset.pattern.permute.xlu0 14
    %536 = vperm.xlu0 %535, %v40
    %v537 = vpop.permute.xlu0 %536
    %539 = vset.pattern.permute.xlu0 14
    %540 = vperm.xlu0 %539, %v41
    %v541 = vpop.permute.xlu0 %540
    %543 = vset.pattern.permute.xlu0 14
    %544 = vperm.xlu0 %543, %v42
    %v545 = vpop.permute.xlu0 %544
    %v547 = vlaneseq
    %v548 = vshrl.u32 %v547, 7
    %v549 = vsub.s32 6, %v548
    %v550 = vrot.slane %v133, %v549
    %v551 = vmul.f32 %v533, %v550
    %v552 = vmul.f32 %v537, %v550
    %v553 = vmul.f32 %v541, %v550
    %v554 = vmul.f32 %v545, %v550
    %v555 = vadd.f32 %v527, %v551
    %v556 = vadd.f32 %v528, %v552
    %v557 = vadd.f32 %v529, %v553
    %v558 = vadd.f32 %v530, %v554
    %559 = vset.pattern.permute.xlu0 15
    %560 = vperm.xlu0 %559, %v39
    %v561 = vpop.permute.xlu0 %560
    %563 = vset.pattern.permute.xlu0 15
    %564 = vperm.xlu0 %563, %v40
    %v565 = vpop.permute.xlu0 %564
    %567 = vset.pattern.permute.xlu0 15
    %568 = vperm.xlu0 %567, %v41
    %v569 = vpop.permute.xlu0 %568
    %571 = vset.pattern.permute.xlu0 15
    %572 = vperm.xlu0 %571, %v42
    %v573 = vpop.permute.xlu0 %572
    %v575 = vlaneseq
    %v576 = vshrl.u32 %v575, 7
    %v577 = vsub.s32 7, %v576
    %v578 = vrot.slane %v133, %v577
    %v579 = vmul.f32 %v561, %v578
    %v580 = vmul.f32 %v565, %v578
    %v581 = vmul.f32 %v569, %v578
    %v582 = vmul.f32 %v573, %v578
    %v583 = vadd.f32 %v555, %v579
    %v584 = vadd.f32 %v556, %v580
    %v585 = vadd.f32 %v557, %v581
    %v586 = vadd.f32 %v558, %v582
    %587 = vset.pattern.permute.xlu0 16
    %588 = vperm.xlu0 %587, %v39
    %v589 = vpop.permute.xlu0 %588
    %591 = vset.pattern.permute.xlu0 16
    %592 = vperm.xlu0 %591, %v40
    %v593 = vpop.permute.xlu0 %592
    %595 = vset.pattern.permute.xlu0 16
    %596 = vperm.xlu0 %595, %v41
    %v597 = vpop.permute.xlu0 %596
    %599 = vset.pattern.permute.xlu0 16
    %600 = vperm.xlu0 %599, %v42
    %v601 = vpop.permute.xlu0 %600
    %v603 = vlaneseq
    %v604 = vshrl.u32 %v603, 7
    %v605 = vsub.s32 0, %v604
    %v606 = vrot.slane %v134, %v605
    %v607 = vmul.f32 %v589, %v606
    %v608 = vmul.f32 %v593, %v606
    %v609 = vmul.f32 %v597, %v606
    %v610 = vmul.f32 %v601, %v606
    %v611 = vadd.f32 %v583, %v607
    %v612 = vadd.f32 %v584, %v608
    %v613 = vadd.f32 %v585, %v609
    %v614 = vadd.f32 %v586, %v610
    %615 = vset.pattern.permute.xlu0 17
    %616 = vperm.xlu0 %615, %v39
    %v617 = vpop.permute.xlu0 %616
    %619 = vset.pattern.permute.xlu0 17
    %620 = vperm.xlu0 %619, %v40
    %v621 = vpop.permute.xlu0 %620
    %623 = vset.pattern.permute.xlu0 17
    %624 = vperm.xlu0 %623, %v41
    %v625 = vpop.permute.xlu0 %624
    %627 = vset.pattern.permute.xlu0 17
    %628 = vperm.xlu0 %627, %v42
    %v629 = vpop.permute.xlu0 %628
    %v631 = vlaneseq
    %v632 = vshrl.u32 %v631, 7
    %v633 = vsub.s32 1, %v632
    %v634 = vrot.slane %v134, %v633
    %v635 = vmul.f32 %v617, %v634
    %v636 = vmul.f32 %v621, %v634
    %v637 = vmul.f32 %v625, %v634
    %v638 = vmul.f32 %v629, %v634
    %v639 = vadd.f32 %v611, %v635
    %v640 = vadd.f32 %v612, %v636
    %v641 = vadd.f32 %v613, %v637
    %v642 = vadd.f32 %v614, %v638
    %643 = vset.pattern.permute.xlu0 18
    %644 = vperm.xlu0 %643, %v39
    %v645 = vpop.permute.xlu0 %644
    %647 = vset.pattern.permute.xlu0 18
    %648 = vperm.xlu0 %647, %v40
    %v649 = vpop.permute.xlu0 %648
    %651 = vset.pattern.permute.xlu0 18
    %652 = vperm.xlu0 %651, %v41
    %v653 = vpop.permute.xlu0 %652
    %655 = vset.pattern.permute.xlu0 18
    %656 = vperm.xlu0 %655, %v42
    %v657 = vpop.permute.xlu0 %656
    %v659 = vlaneseq
    %v660 = vshrl.u32 %v659, 7
    %v661 = vsub.s32 2, %v660
    %v662 = vrot.slane %v134, %v661
    %v663 = vmul.f32 %v645, %v662
    %v664 = vmul.f32 %v649, %v662
    %v665 = vmul.f32 %v653, %v662
    %v666 = vmul.f32 %v657, %v662
    %v667 = vadd.f32 %v639, %v663
    %v668 = vadd.f32 %v640, %v664
    %v669 = vadd.f32 %v641, %v665
    %v670 = vadd.f32 %v642, %v666
    %671 = vset.pattern.permute.xlu0 19
    %672 = vperm.xlu0 %671, %v39
    %v673 = vpop.permute.xlu0 %672
    %675 = vset.pattern.permute.xlu0 19
    %676 = vperm.xlu0 %675, %v40
    %v677 = vpop.permute.xlu0 %676
    %679 = vset.pattern.permute.xlu0 19
    %680 = vperm.xlu0 %679, %v41
    %v681 = vpop.permute.xlu0 %680
    %683 = vset.pattern.permute.xlu0 19
    %684 = vperm.xlu0 %683, %v42
    %v685 = vpop.permute.xlu0 %684
    %v687 = vlaneseq
    %v688 = vshrl.u32 %v687, 7
    %v689 = vsub.s32 3, %v688
    %v690 = vrot.slane %v134, %v689
    %v691 = vmul.f32 %v673, %v690
    %v692 = vmul.f32 %v677, %v690
    %v693 = vmul.f32 %v681, %v690
    %v694 = vmul.f32 %v685, %v690
    %v695 = vadd.f32 %v667, %v691
    %v696 = vadd.f32 %v668, %v692
    %v697 = vadd.f32 %v669, %v693
    %v698 = vadd.f32 %v670, %v694
    %700 = vset.pattern.permute.xlu0 0
    %701 = vperm.xlu0 %700, %v135
    %v702 = vpop.permute.xlu0 %701
    %705 = vset.pattern.permute.xlu0 0
    %706 = vperm.xlu0 %705, %v136
    %v707 = vpop.permute.xlu0 %706
    %710 = vset.pattern.permute.xlu0 0
    %711 = vperm.xlu0 %710, %v137
    %v712 = vpop.permute.xlu0 %711
    %715 = vset.pattern.permute.xlu0 0
    %716 = vperm.xlu0 %715, %v138
    %v717 = vpop.permute.xlu0 %716
    %v719 = vadd.f32 %v695, %v702
    %v720 = vadd.f32 %v696, %v707
    %v721 = vadd.f32 %v697, %v712
    %v722 = vadd.f32 %v698, %v717
    %v723 = vtanh.pop %v719
    %v724 = vtanh.pop %v720
    %v725 = vtanh.pop %v721
    %v726 = vtanh.pop %v722
    %v727 = vld [vmem:[%s6] sm:$0x3]
    %729 = vset.pattern.permute.xlu0 0
    %730 = vperm.xlu0 %729, %v43
    %v731 = vpop.permute.xlu0 %730
    %v733 = vlaneseq
    %v734 = vshrl.u32 %v733, 7
    %v735 = vsub.s32 0, %v734
    %v736 = vrot.slane %v723, %v735
    %v737 = vmul.f32 %v731, %v736
    %738 = vset.pattern.permute.xlu0 1
    %739 = vperm.xlu0 %738, %v43
    %v740 = vpop.permute.xlu0 %739
    %v742 = vlaneseq
    %v743 = vshrl.u32 %v742, 7
    %v744 = vsub.s32 1, %v743
    %v745 = vrot.slane %v723, %v744
    %v746 = vmul.f32 %v740, %v745
    %v747 = vadd.f32 %v737, %v746
    %748 = vset.pattern.permute.xlu0 2
    %749 = vperm.xlu0 %748, %v43
    %v750 = vpop.permute.xlu0 %749
    %v752 = vlaneseq
    %v753 = vshrl.u32 %v752, 7
    %v754 = vsub.s32 2, %v753
    %v755 = vrot.slane %v723, %v754
    %v756 = vmul.f32 %v750, %v755
    %v757 = vadd.f32 %v747, %v756
    %758 = vset.pattern.permute.xlu0 3
    %759 = vperm.xlu0 %758, %v43
    %v760 = vpop.permute.xlu0 %759
    %v762 = vlaneseq
    %v763 = vshrl.u32 %v762, 7
    %v764 = vsub.s32 3, %v763
    %v765 = vrot.slane %v723, %v764
    %v766 = vmul.f32 %v760, %v765
    %v767 = vadd.f32 %v757, %v766
    %768 = vset.pattern.permute.xlu0 4
    %769 = vperm.xlu0 %768, %v43
    %v770 = vpop.permute.xlu0 %769
    %v772 = vlaneseq
    %v773 = vshrl.u32 %v772, 7
    %v774 = vsub.s32 4, %v773
    %v775 = vrot.slane %v723, %v774
    %v776 = vmul.f32 %v770, %v775
    %v777 = vadd.f32 %v767, %v776
    %778 = vset.pattern.permute.xlu0 5
    %779 = vperm.xlu0 %778, %v43
    %v780 = vpop.permute.xlu0 %779
    %v782 = vlaneseq
    %v783 = vshrl.u32 %v782, 7
    %v784 = vsub.s32 5, %v783
    %v785 = vrot.slane %v723, %v784
    %v786 = vmul.f32 %v780, %v785
    %v787 = vadd.f32 %v777, %v786
    %788 = vset.pattern.permute.xlu0 6
    %789 = vperm.xlu0 %788, %v43
    %v790 = vpop.permute.xlu0 %789
    %v792 = vlaneseq
    %v793 = vshrl.u32 %v792, 7
    %v794 = vsub.s32 6, %v793
    %v795 = vrot.slane %v723, %v794
    %v796 = vmul.f32 %v790, %v795
    %v797 = vadd.f32 %v787, %v796
    %798 = vset.pattern.permute.xlu0 7
    %799 = vperm.xlu0 %798, %v43
    %v800 = vpop.permute.xlu0 %799
    %v802 = vlaneseq
    %v803 = vshrl.u32 %v802, 7
    %v804 = vsub.s32 7, %v803
    %v805 = vrot.slane %v723, %v804
    %v806 = vmul.f32 %v800, %v805
    %v807 = vadd.f32 %v797, %v806
    %808 = vset.pattern.permute.xlu0 8
    %809 = vperm.xlu0 %808, %v43
    %v810 = vpop.permute.xlu0 %809
    %v812 = vlaneseq
    %v813 = vshrl.u32 %v812, 7
    %v814 = vsub.s32 0, %v813
    %v815 = vrot.slane %v724, %v814
    %v816 = vmul.f32 %v810, %v815
    %v817 = vadd.f32 %v807, %v816
    %818 = vset.pattern.permute.xlu0 9
    %819 = vperm.xlu0 %818, %v43
    %v820 = vpop.permute.xlu0 %819
    %v822 = vlaneseq
    %v823 = vshrl.u32 %v822, 7
    %v824 = vsub.s32 1, %v823
    %v825 = vrot.slane %v724, %v824
    %v826 = vmul.f32 %v820, %v825
    %v827 = vadd.f32 %v817, %v826
    %828 = vset.pattern.permute.xlu0 10
    %829 = vperm.xlu0 %828, %v43
    %v830 = vpop.permute.xlu0 %829
    %v832 = vlaneseq
    %v833 = vshrl.u32 %v832, 7
    %v834 = vsub.s32 2, %v833
    %v835 = vrot.slane %v724, %v834
    %v836 = vmul.f32 %v830, %v835
    %v837 = vadd.f32 %v827, %v836
    %838 = vset.pattern.permute.xlu0 11
    %839 = vperm.xlu0 %838, %v43
    %v840 = vpop.permute.xlu0 %839
    %v842 = vlaneseq
    %v843 = vshrl.u32 %v842, 7
    %v844 = vsub.s32 3, %v843
    %v845 = vrot.slane %v724, %v844
    %v846 = vmul.f32 %v840, %v845
    %v847 = vadd.f32 %v837, %v846
    %848 = vset.pattern.permute.xlu0 12
    %849 = vperm.xlu0 %848, %v43
    %v850 = vpop.permute.xlu0 %849
    %v852 = vlaneseq
    %v853 = vshrl.u32 %v852, 7
    %v854 = vsub.s32 4, %v853
    %v855 = vrot.slane %v724, %v854
    %v856 = vmul.f32 %v850, %v855
    %v857 = vadd.f32 %v847, %v856
    %858 = vset.pattern.permute.xlu0 13
    %859 = vperm.xlu0 %858, %v43
    %v860 = vpop.permute.xlu0 %859
    %v862 = vlaneseq
    %v863 = vshrl.u32 %v862, 7
    %v864 = vsub.s32 5, %v863
    %v865 = vrot.slane %v724, %v864
    %v866 = vmul.f32 %v860, %v865
    %v867 = vadd.f32 %v857, %v866
    %868 = vset.pattern.permute.xlu0 14
    %869 = vperm.xlu0 %868, %v43
    %v870 = vpop.permute.xlu0 %869
    %v872 = vlaneseq
    %v873 = vshrl.u32 %v872, 7
    %v874 = vsub.s32 6, %v873
    %v875 = vrot.slane %v724, %v874
    %v876 = vmul.f32 %v870, %v875
    %v877 = vadd.f32 %v867, %v876
    %878 = vset.pattern.permute.xlu0 15
    %879 = vperm.xlu0 %878, %v43
    %v880 = vpop.permute.xlu0 %879
    %v882 = vlaneseq
    %v883 = vshrl.u32 %v882, 7
    %v884 = vsub.s32 7, %v883
    %v885 = vrot.slane %v724, %v884
    %v886 = vmul.f32 %v880, %v885
    %v887 = vadd.f32 %v877, %v886
    %888 = vset.pattern.permute.xlu0 16
    %889 = vperm.xlu0 %888, %v43
    %v890 = vpop.permute.xlu0 %889
    %v892 = vlaneseq
    %v893 = vshrl.u32 %v892, 7
    %v894 = vsub.s32 0, %v893
    %v895 = vrot.slane %v725, %v894
    %v896 = vmul.f32 %v890, %v895
    %v897 = vadd.f32 %v887, %v896
    %898 = vset.pattern.permute.xlu0 17
    %899 = vperm.xlu0 %898, %v43
    %v900 = vpop.permute.xlu0 %899
    %v902 = vlaneseq
    %v903 = vshrl.u32 %v902, 7
    %v904 = vsub.s32 1, %v903
    %v905 = vrot.slane %v725, %v904
    %v906 = vmul.f32 %v900, %v905
    %v907 = vadd.f32 %v897, %v906
    %908 = vset.pattern.permute.xlu0 18
    %909 = vperm.xlu0 %908, %v43
    %v910 = vpop.permute.xlu0 %909
    %v912 = vlaneseq
    %v913 = vshrl.u32 %v912, 7
    %v914 = vsub.s32 2, %v913
    %v915 = vrot.slane %v725, %v914
    %v916 = vmul.f32 %v910, %v915
    %v917 = vadd.f32 %v907, %v916
    %918 = vset.pattern.permute.xlu0 19
    %919 = vperm.xlu0 %918, %v43
    %v920 = vpop.permute.xlu0 %919
    %v922 = vlaneseq
    %v923 = vshrl.u32 %v922, 7
    %v924 = vsub.s32 3, %v923
    %v925 = vrot.slane %v725, %v924
    %v926 = vmul.f32 %v920, %v925
    %v927 = vadd.f32 %v917, %v926
    %928 = vset.pattern.permute.xlu0 20
    %929 = vperm.xlu0 %928, %v43
    %v930 = vpop.permute.xlu0 %929
    %v932 = vlaneseq
    %v933 = vshrl.u32 %v932, 7
    %v934 = vsub.s32 4, %v933
    %v935 = vrot.slane %v725, %v934
    %v936 = vmul.f32 %v930, %v935
    %v937 = vadd.f32 %v927, %v936
    %938 = vset.pattern.permute.xlu0 21
    %939 = vperm.xlu0 %938, %v43
    %v940 = vpop.permute.xlu0 %939
    %v942 = vlaneseq
    %v943 = vshrl.u32 %v942, 7
    %v944 = vsub.s32 5, %v943
    %v945 = vrot.slane %v725, %v944
    %v946 = vmul.f32 %v940, %v945
    %v947 = vadd.f32 %v937, %v946
    %948 = vset.pattern.permute.xlu0 22
    %949 = vperm.xlu0 %948, %v43
    %v950 = vpop.permute.xlu0 %949
    %v952 = vlaneseq
    %v953 = vshrl.u32 %v952, 7
    %v954 = vsub.s32 6, %v953
    %v955 = vrot.slane %v725, %v954
    %v956 = vmul.f32 %v950, %v955
    %v957 = vadd.f32 %v947, %v956
    %958 = vset.pattern.permute.xlu0 23
    %959 = vperm.xlu0 %958, %v43
    %v960 = vpop.permute.xlu0 %959
    %v962 = vlaneseq
    %v963 = vshrl.u32 %v962, 7
    %v964 = vsub.s32 7, %v963
    %v965 = vrot.slane %v725, %v964
    %v966 = vmul.f32 %v960, %v965
    %v967 = vadd.f32 %v957, %v966
    %968 = vset.pattern.permute.xlu0 24
    %969 = vperm.xlu0 %968, %v43
    %v970 = vpop.permute.xlu0 %969
    %v972 = vlaneseq
    %v973 = vshrl.u32 %v972, 7
    %v974 = vsub.s32 0, %v973
    %v975 = vrot.slane %v726, %v974
    %v976 = vmul.f32 %v970, %v975
    %v977 = vadd.f32 %v967, %v976
    %978 = vset.pattern.permute.xlu0 25
    %979 = vperm.xlu0 %978, %v43
    %v980 = vpop.permute.xlu0 %979
    %v982 = vlaneseq
    %v983 = vshrl.u32 %v982, 7
    %v984 = vsub.s32 1, %v983
    %v985 = vrot.slane %v726, %v984
    %v986 = vmul.f32 %v980, %v985
    %v987 = vadd.f32 %v977, %v986
    %989 = vset.pattern.permute.xlu0 0
    %990 = vperm.xlu0 %989, %v727
    %v991 = vpop.permute.xlu0 %990
    %v993 = vadd.f32 %v987, %v991
    %v994 = vtanh.pop %v993
    %v995 = vld [vmem:[#allocation2] sm:$0x1]
    %997 = vset.pattern.permute.xlu0 0
    %998 = vperm.xlu0 %997, %v44
    %v999 = vpop.permute.xlu0 %998
    %v1001 = vlaneseq
    %v1002 = vshrl.u32 %v1001, 7
    %v1003 = vsub.s32 0, %v1002
    %v1004 = vrot.slane %v999, %v1003
    %v1005 = vmul.f32 %v1004, %v994
    %1006 = vset.pattern.permute.xlu0 1
    %1007 = vperm.xlu0 %1006, %v44
    %v1008 = vpop.permute.xlu0 %1007
    %v1010 = vlaneseq
    %v1011 = vshrl.u32 %v1010, 7
    %v1012 = vsub.s32 0, %v1011
    %v1013 = vrot.slane %v1008, %v1012
    %v1014 = vmul.f32 %v1013, %v994
    %v1016 = vrot.slane %v1014, 1
    %v1018 = vadd.f32 %v1005, %v1016
    %1020 = vset.pattern.permute.xlu0 0
    %1021 = vperm.xlu0 %1020, %v995
    %v1022 = vpop.permute.xlu0 %1021
    %v1024 = vlaneseq
    %v1025 = vshrl.u32 %v1024, 7
    %v1026 = vsub.s32 0, %v1025
    %v1027 = vrot.slane %v1022, %v1026
    %v1028 = vadd.f32 %v1018, %v1027
    %1029 = vst [vmem:[#allocation3] sm:$0x1] %v1028
    // Predicated region
    $region38: #{tpu_custom_call.1} parent=1 // pred_check
      _
    $region39: #{tpu_custom_call.1} parent=1 // pred_check_branch
      %1031 = sbr.rel (0) target = $region41
    $region40: #{tpu_custom_call.1} parent=1 // pred_region
      %s1033 = ssub.s32 16, 16
      %1034 = vsyncadd [#allocation4], %s1033
      %s1036 = sshll.u32 [#allocation3], 4
      %s1037 = int_to_ptr.vmem [resolvable:$true] %s1036
      %1039 = dma.vmem_to_hbm [thread:$0]  %s1037, 16, %s9, [#allocation4]
    $region41: #{tpu_custom_call.1} parent=1 // pred_fallthru
      _
    // Predicated region
    $region42: #{tpu_custom_call.1} parent=1 // pred_check
      _
    $region43: #{tpu_custom_call.1} parent=1 // pred_check_branch
      %1041 = sbr.rel (0) target = $region45
    $region44: #{tpu_custom_call.1} parent=1 // pred_region
      %1042 = dma.done [#allocation4], 16
    $region45: #{tpu_custom_call.1} parent=1 // pred_fallthru
      _
    %1043 = vsyncpa [#allocation4], 1

</llo_original>
